<compile_context>
chip_gen: v7x
topology: tpu7x:2x2x1
jax: 0.10.0
libtpu: 0.0.40
codegen_flags: <defaults>
</compile_context>

<pallas_src>
import functools

import jax
import jax.numpy as jnp
from jax.experimental import pallas as pl
from jax.experimental.pallas import tpu as pltpu

GAMMA = 2.0   # cfg.focal_loss_gamma (typical value)
ALPHA = 0.25  # cfg.focal_loss_alpha (typical value)


def _round_up(n, m):
    return pl.cdiv(n, m) * m


def _pow_static(x, gamma):
    """x**gamma with small integer gamma lowered to VPU multiplies (no EUP)."""
    gi = int(gamma)
    if float(gi) == float(gamma) and 0 <= gi <= 4:
        if gi == 0:
            return jnp.ones_like(x)
        r = x
        for _ in range(gi - 1):
            r = r * x
        return r
    return x ** gamma


def _cores_per_chip():
    """2 on v7x (2 TensorCores/chip), 1 on v5e/v6e (single TC)."""
    try:
        kind = jax.devices()[0].device_kind.lower()
    except Exception:
        return 1
    return 2 if ("v7" in kind or "7x" in kind) else 1


def focal_loss_kernel(logits_ref, targets_ref, out_ref, acc_ref, *, gamma, alpha):
    i = pl.program_id(1)  # inner (reduction) axis

    @pl.when(i == 0)
    def _init():
        acc_ref[...] = jnp.zeros_like(acc_ref)

    x = logits_ref[...].astype(jnp.float32)          # (TM, C)
    t = targets_ref[...].astype(jnp.int32)           # (TM, 1)
    tm, c = x.shape
    class_range = jax.lax.broadcasted_iota(jnp.int32, (tm, c), 1)

    # Numerically stable sigmoid / log-sigmoid with 2 transcendentals + 1
    # exact reciprocal per element:
    #   z = exp(-|x|)                        (EUP)
    #   softplus(x) = max(x,0) + log(1+z)    (EUP)
    #   log p     = x - softplus(x)
    #   log (1-p) = -softplus(x)
    #   p         = where(x>=0, 1, z) / (1+z)
    z = jnp.exp(-jnp.abs(x))
    sp = jnp.maximum(x, 0.0) + jnp.log(1.0 + z)
    log_p = x - sp
    log_1mp = -sp
    p = jnp.where(x >= 0.0, 1.0, z) * pl.reciprocal(1.0 + z, approx=False)
    one_minus_p = 1.0 - p

    term1 = _pow_static(one_minus_p, gamma) * log_p   # (1-p)^g * log p
    term2 = _pow_static(p, gamma) * log_1mp           # p^g     * log(1-p)

    # loss = -alpha*term1 on the one-hot positive class,
    #        -(1-alpha)*term2 on the other classes of rows with t >= 0,
    #        0 on ignored rows (t < 0): two compares + two selects.
    is_pos = t == class_range                         # (TM, C)
    is_valid = t >= 0                                 # (TM, 1), broadcast on lanes
    loss = jnp.where(is_pos, (-alpha) * term1,
                     jnp.where(is_valid, (alpha - 1.0) * term2, 0.0))

    # Sublane-only reduce into a resident (1, C) accumulator; the lane/scalar
    # collapse happens once in the wrapper.
    acc_ref[...] += jnp.sum(loss, axis=0, keepdims=True)

    @pl.when(i == pl.num_programs(1) - 1)
    def _finalize():
        out_ref[...] = acc_ref[...].reshape(out_ref.shape)


def sigmoid_focal_loss(logits, targets, *, gamma=GAMMA, alpha=ALPHA,
                       tm=8192, partitions=None):
    """Sum of sigmoid focal loss over all anchor points (scalar float32)."""
    M, C = logits.shape
    P = _cores_per_chip() if partitions is None else partitions

    # Large tiles amortize the ~0.35us per-grid-step overhead; clamp so tiny
    # inputs aren't over-padded. Multiple of 32 keeps every sub-32-bit sublane
    # tiling (bf16 / int16 / int8) legal.
    tm = max(32, min(tm, _round_up(pl.cdiv(M, P), 32)))
    steps = pl.cdiv(M, P * tm)          # inner (reduction) grid extent
    m_pad = P * steps * tm

    if m_pad != M:
        # Padded rows get target = -1 -> both masks are zero -> contribute 0.
        logits = jnp.pad(logits, ((0, m_pad - M), (0, 0)))
        targets = jnp.pad(targets, (0, m_pad - M), constant_values=-1)
    # int16 is plenty for labels in [-1, C-1]; halves targets HBM/VMEM vs int32.
    targets2d = targets.astype(jnp.int16).reshape(m_pad, 1)

    if P > 1:
        # Only reached on multi-TensorCore chips (v7x): explicitly shard the
        # leading partition axis across the TensorCores.
        dim_sem = (pltpu.CORE_PARALLEL, pltpu.ARBITRARY)
    else:
        dim_sem = ("arbitrary", "arbitrary")

    elem_bytes = jnp.dtype(logits.dtype).itemsize
    cost = pl.CostEstimate(
        flops=int(16 * m_pad * C),
        transcendentals=int(3 * m_pad * C),
        bytes_accessed=int(elem_bytes * m_pad * C + 2 * m_pad + 4 * P * C),
    )

    partial = pl.pallas_call(
        functools.partial(focal_loss_kernel, gamma=gamma, alpha=alpha),
        out_shape=jax.ShapeDtypeStruct((P, 1, C), jnp.float32),
        grid_spec=pltpu.PrefetchScalarGridSpec(
            num_scalar_prefetch=0,
            grid=(P, steps),
            in_specs=[
                pl.BlockSpec((tm, C), lambda c, i: (c * steps + i, 0)),
                pl.BlockSpec((tm, 1), lambda c, i: (c * steps + i, 0)),
            ],
            out_specs=pl.BlockSpec((1, 1, C), lambda c, i: (c, 0, 0)),
            scratch_shapes=[pltpu.VMEM((1, C), jnp.float32)],
        ),
        compiler_params=pltpu.CompilerParams(dimension_semantics=dim_sem),
        cost_estimate=cost,
    )(logits, targets2d)

    # Final tiny collapse of the (P, 1, C) partials in plain XLA.
    return jnp.sum(partial)


def sigmoid_focal_loss_ref(logits, targets, gamma=GAMMA, alpha=ALPHA):
    num_classes = logits.shape[1]
    class_range = jnp.arange(num_classes, dtype=jnp.int32)[None, :]
    t = targets.astype(jnp.int32)[:, None]
    p = jax.nn.sigmoid(logits.astype(jnp.float32))
    term1 = (1.0 - p) ** gamma * jnp.log(p)
    term2 = p ** gamma * jnp.log(1.0 - p)
    loss = (-(t == class_range).astype(jnp.float32) * term1 * alpha
            - jnp.logical_and(t != class_range, t >= 0).astype(jnp.float32)
              * term2 * (1.0 - alpha))
    return loss.sum()


if __name__ == "__main__":
    key = jax.random.PRNGKey(0)
    k_logits, k_targets = jax.random.split(key)

    # Small flattened FPN anchor set: N=2 images, levels 8x8 + 4x4 + 2x2.
    M = 2 * (8 * 8 + 4 * 4 + 2 * 2)    # 168 anchor points
    C = 80                              # num_classes

    logits = jax.random.normal(k_logits, (M, C), dtype=jnp.float32)
    # labels in [-1, 79]: -1 = negative/ignored, [0, 79] = positive class
    targets = jax.random.randint(k_targets, (M,), -1, C, dtype=jnp.int32)

    out = jax.block_until_ready(sigmoid_focal_loss(logits, targets))
    ref = jax.block_until_ready(sigmoid_focal_loss_ref(logits, targets))

    assert jnp.allclose(out, ref, rtol=1e-4, atol=1e-3), (out, ref)
    print("KERNEL_OK")
</pallas_src>

<mosaic_0001>
module attributes {stable_mosaic.version = 11 : i64} {
  func.func @focal_loss_kernel(%arg0: i32, %arg1: i32, %arg2: memref<192x80xf32, #tpu.memory_space<vmem>>, %arg3: memref<192x1xi16, #tpu.memory_space<vmem>>, %arg4: memref<1x1x80xf32, #tpu.memory_space<vmem>>, %arg5: memref<1x80xf32, #tpu.memory_space<vmem>>) attributes {dimension_semantics = [#tpu.dimension_semantics<arbitrary>, #tpu.dimension_semantics<arbitrary>], iteration_bounds = array<i64: 1, 1>, scalar_prefetch = 0 : i64, scratch_operands = 1 : i64, tpu.core_type = #tpu.core_type<tc>, window_params = [{transform_indices = @transform_0, window_bounds = array<i64: 192, 80>}, {transform_indices = @transform_1, window_bounds = array<i64: 192, 1>}, {transform_indices = @transform_2, window_bounds = array<i64: 1, 1, 80>}]} {
    %c0_i32 = arith.constant 0 : i32
    %0 = arith.cmpi eq, %arg1, %c0_i32 : i32
    %1 = arith.extui %0 : i1 to i32
    %c0_i32_0 = arith.constant 0 : i32
    %2 = arith.cmpi ne, %1, %c0_i32_0 : i32
    scf.if %2 {
      %cst_22 = arith.constant 0.000000e+00 : f32
      %55 = vector.broadcast %cst_22 : f32 to vector<1x80xf32>
      %c0_23 = arith.constant 0 : index
      %c0_24 = arith.constant 0 : index
      %56 = vector.load %arg5[%c0_23, %c0_24] : memref<1x80xf32, #tpu.memory_space<vmem>>, vector<1x80xf32>
      tpu.vector_store %arg5[%c0_23, %c0_24], %55 {strides = array<i32>} : memref<1x80xf32, #tpu.memory_space<vmem>>, vector<1x80xf32>,
    } else {
    }
    %c0 = arith.constant 0 : index
    %c0_1 = arith.constant 0 : index
    %3 = vector.load %arg2[%c0, %c0_1] : memref<192x80xf32, #tpu.memory_space<vmem>>, vector<192x80xf32>
    %c0_2 = arith.constant 0 : index
    %c0_3 = arith.constant 0 : index
    %4 = vector.load %arg3[%c0_2, %c0_3] : memref<192x1xi16, #tpu.memory_space<vmem>>, vector<192x1xi16>
    %5 = arith.extsi %4 : vector<192x1xi16> to vector<192x1xi32>
    %6 = tpu.iota {dimensions = array<i32: 1>} : vector<192x80xi32>
    %7 = math.absf %3 : vector<192x80xf32>
    %cst = arith.constant 0.000000e+00 : f32
    %8 = vector.broadcast %cst : f32 to vector<192x80xf32>
    %9 = arith.subf %8, %7 : vector<192x80xf32>
    %10 = math.exp %9 : vector<192x80xf32>
    %cst_4 = arith.constant 0.000000e+00 : f32
    %11 = vector.broadcast %cst_4 : f32 to vector<192x80xf32>
    %12 = arith.maximumf %3, %11 : vector<192x80xf32>
    %cst_5 = arith.constant 1.000000e+00 : f32
    %13 = vector.broadcast %cst_5 : f32 to vector<192x80xf32>
    %14 = arith.addf %13, %10 : vector<192x80xf32>
    %15 = math.log %14 : vector<192x80xf32>
    %16 = arith.addf %12, %15 : vector<192x80xf32>
    %17 = arith.subf %3, %16 : vector<192x80xf32>
    %cst_6 = arith.constant 0.000000e+00 : f32
    %18 = vector.broadcast %cst_6 : f32 to vector<192x80xf32>
    %19 = arith.subf %18, %16 : vector<192x80xf32>
    %cst_7 = arith.constant 0.000000e+00 : f32
    %20 = vector.broadcast %cst_7 : f32 to vector<192x80xf32>
    %21 = arith.cmpf oge, %3, %20 : vector<192x80xf32>
    %cst_8 = arith.constant 1.000000e+00 : f32
    %22 = vector.broadcast %cst_8 : f32 to vector<192x80xf32>
    %23 = arith.select %21, %22, %10 : vector<192x80xi1>, vector<192x80xf32>
    %cst_9 = arith.constant 1.000000e+00 : f32
    %24 = vector.broadcast %cst_9 : f32 to vector<192x80xf32>
    %25 = arith.addf %24, %10 : vector<192x80xf32>
    %26 = tpu.reciprocal %25 : vector<192x80xf32> -> vector<192x80xf32>
    %27 = arith.mulf %23, %26 : vector<192x80xf32>
    %cst_10 = arith.constant 1.000000e+00 : f32
    %28 = vector.broadcast %cst_10 : f32 to vector<192x80xf32>
    %29 = arith.subf %28, %27 : vector<192x80xf32>
    %30 = arith.mulf %29, %29 : vector<192x80xf32>
    %31 = arith.mulf %30, %17 : vector<192x80xf32>
    %32 = arith.mulf %27, %27 : vector<192x80xf32>
    %33 = arith.mulf %32, %19 : vector<192x80xf32>
    %34 = vector.broadcast %5 : vector<192x1xi32> to vector<192x80xi32>
    %35 = arith.cmpi eq, %34, %6 : vector<192x80xi32>
    %c0_i32_11 = arith.constant 0 : i32
    %36 = vector.broadcast %c0_i32_11 : i32 to vector<192x1xi32>
    %37 = arith.cmpi sge, %5, %36 : vector<192x1xi32>
    %cst_12 = arith.constant -2.500000e-01 : f32
    %38 = vector.broadcast %cst_12 : f32 to vector<192x80xf32>
    %39 = arith.mulf %38, %31 : vector<192x80xf32>
    %cst_13 = arith.constant -7.500000e-01 : f32
    %40 = vector.broadcast %cst_13 : f32 to vector<192x80xf32>
    %41 = arith.mulf %40, %33 : vector<192x80xf32>
    %cst_14 = arith.constant 0.000000e+00 : f32
    %42 = vector.shape_cast %37 : vector<192x1xi1> to vector<192x1xi1>
    %43 = vector.broadcast %42 : vector<192x1xi1> to vector<192x80xi1>
    %44 = vector.broadcast %cst_14 : f32 to vector<192x80xf32>
    %45 = arith.select %43, %41, %44 : vector<192x80xi1>, vector<192x80xf32>
    %46 = arith.select %35, %39, %45 : vector<192x80xi1>, vector<192x80xf32>
    %c0_15 = arith.constant 0 : index
    %c0_16 = arith.constant 0 : index
    %47 = vector.load %arg5[%c0_15, %c0_16] : memref<1x80xf32, #tpu.memory_space<vmem>>, vector<1x80xf32>
    %cst_17 = arith.constant dense<0.000000e+00> : vector<80xf32>
    %48 = vector.multi_reduction <add>, %46, %cst_17 [0] : vector<192x80xf32> to vector<80xf32>
    %49 = vector.shape_cast %48 : vector<80xf32> to vector<1x80xf32>
    %50 = arith.addf %47, %49 : vector<1x80xf32>
    %c0_18 = arith.constant 0 : index
    %c0_19 = arith.constant 0 : index
    %51 = vector.load %arg5[%c0_18, %c0_19] : memref<1x80xf32, #tpu.memory_space<vmem>>, vector<1x80xf32>
    tpu.vector_store %arg5[%c0_18, %c0_19], %50 {strides = array<i32>} : memref<1x80xf32, #tpu.memory_space<vmem>>, vector<1x80xf32>,
    %c0_i32_20 = arith.constant 0 : i32
    %52 = arith.cmpi eq, %arg1, %c0_i32_20 : i32
    %53 = arith.extui %52 : i1 to i32
    %c0_i32_21 = arith.constant 0 : i32
    %54 = arith.cmpi ne, %53, %c0_i32_21 : i32
    scf.if %54 {
      %c0_22 = arith.constant 0 : index
      %c0_23 = arith.constant 0 : index
      %55 = vector.load %arg5[%c0_22, %c0_23] : memref<1x80xf32, #tpu.memory_space<vmem>>, vector<1x80xf32>
      %56 = vector.shape_cast %55 : vector<1x80xf32> to vector<1x1x80xf32>
      %c0_24 = arith.constant 0 : index
      %c0_25 = arith.constant 0 : index
      %c0_26 = arith.constant 0 : index
      %57 = vector.load %arg4[%c0_24, %c0_25, %c0_26] : memref<1x1x80xf32, #tpu.memory_space<vmem>>, vector<1x1x80xf32>
      tpu.vector_store %arg4[%c0_24, %c0_25, %c0_26], %56 {strides = array<i32>} : memref<1x1x80xf32, #tpu.memory_space<vmem>>, vector<1x1x80xf32>,
    } else {
    }
    return
  }
  func.func @transform_0(%arg0: i32, %arg1: i32) -> (i32, i32) {
    %c1_i32 = arith.constant 1 : i32
    %0 = arith.muli %arg0, %c1_i32 : i32
    %1 = arith.addi %0, %arg1 : i32
    %c0_i32 = arith.constant 0 : i32
    %c0_i32_0 = arith.constant 0 : i32
    return %1, %c0_i32 : i32, i32
  }
  func.func @transform_1(%arg0: i32, %arg1: i32) -> (i32, i32) {
    %c1_i32 = arith.constant 1 : i32
    %0 = arith.muli %arg0, %c1_i32 : i32
    %1 = arith.addi %0, %arg1 : i32
    %c0_i32 = arith.constant 0 : i32
    %c0_i32_0 = arith.constant 0 : i32
    return %1, %c0_i32 : i32, i32
  }
  func.func @transform_2(%arg0: i32, %arg1: i32) -> (i32, i32, i32) {
    %c0_i32 = arith.constant 0 : i32
    %c0_i32_0 = arith.constant 0 : i32
    %c0_i32_1 = arith.constant 0 : i32
    return %arg0, %c0_i32, %c0_i32_0 : i32, i32, i32
  }
}

</mosaic_0001>

<llo_original>
// kernel: tpu_custom_call.1
$region0: #{tpu_custom_call.1}
  #allocation0 [shape = 'u32[]', space=smem, size = 0x4, offset = 0x4, fixed_abs, tag = 'smem constant byte address 0x4 - core index']
  #allocation1 [shape = 'u32[144,128]{1,0:T(1,128)}', space=vmem, size = 0x12000, scoped, tag = 'internal scratch']
  #allocation2 [shape = 'f32[1,80]{1,0:T(1,128)}', space=vmem, size = 0x200, scoped, tag = 'scratch operand']
  %s0 = inlined_call_operand.vmem [shape: f32[192,80], index: 0, kind: input, shape index: {}]
  %s1 = inlined_call_operand.vmem [shape: s16[192,1], index: 1, kind: input, shape index: {}]
  %s2 = inlined_call_operand.hbm [shape: f32[1,1,80], index: 2, kind: output, shape index: {}]
  %s3 = sld [smem:[#allocation0]]
  $region26: #{tpu_custom_call.1} parent=0
    _
  %s5 = ssub.s32 1, %s3
  %s6 = scalar_select 0, %s5, %s3
  $region1: #{tpu_custom_call.1} parent=0
    #allocation3 [shape = 'u8[512]{0}', space=vmem, size = 0x400, scoped, tag = 'output window, operand 0, single buffered']
    #allocation4 [shape = 's32[1]{0}', space=sflag, size = 0x4, scoped, tag = 'scoped memory for tpu_custom_call.1']
    %7 = vsyncpa [#allocation4], 0
    // Predicated region
    $region2: #{tpu_custom_call.1} parent=1 // pred_check
      _
    $region3: #{tpu_custom_call.1} parent=1 // pred_check_branch
      %9 = sbr.rel (0) target = $region5
    $region4: #{tpu_custom_call.1} parent=1 // pred_region
      %s10 = sadd.s32 0, 0
      %s11 = smul.u32 24, %s10
      %p12 = scmp.lt.s32.totalorder %s11, 23
      %s13 = scalar_select %p12, %s11, 23
      %s14 = smul.addr %s13, 8
      %s15 = scalar_lea.vmem %s0, %s14
      %s16 = sadd.s32 0, 0
      %s17 = smul.u32 24, %s16
    $region5: #{tpu_custom_call.1} parent=1 // pred_fallthru
      _
    // Predicated region
    $region6: #{tpu_custom_call.1} parent=1 // pred_check
      _
    $region7: #{tpu_custom_call.1} parent=1 // pred_check_branch
      %19 = sbr.rel (0) target = $region9
    $region8: #{tpu_custom_call.1} parent=1 // pred_region
      %s20 = sadd.s32 0, 0
      %s21 = smul.u32 24, %s20
      %p22 = scmp.lt.s32.totalorder %s21, 23
      %s23 = scalar_select %p22, %s21, 23
      %s24 = smul.addr %s23, 4
      %s25 = scalar_lea.vmem %s1, %s24
      %s26 = sadd.s32 0, 0
      %s27 = smul.u32 24, %s26
    $region9: #{tpu_custom_call.1} parent=1 // pred_fallthru
      _
    %s28 = sadd.s32 0, 0
    %s29 = smul.u32 24, %s28
    %p30 = scmp.lt.s32.totalorder %s29, 23
    %s31 = scalar_select %p30, %s29, 23
    %s32 = smul.addr %s31, 8
    %s33 = scalar_lea.vmem %s0, %s32
    %s34 = sadd.s32 0, 0
    %s35 = smul.u32 24, %s34
    %p36 = scmp.lt.s32.totalorder %s35, 23
    %s37 = scalar_select %p36, %s35, 23
    %s38 = smul.addr %s37, 4
    %s39 = scalar_lea.vmem %s1, %s38
    %s40 = sadd.s32 0, 0
    %s41 = smul.u32 24, %s40
    %p42 = scmp.lt.s32.totalorder %s41, 23
    %s43 = scalar_select %p42, %s41, 23
    %s44 = smul.addr %s43, 8
    %s45 = scalar_lea.vmem %s0, %s44
    %s46 = sadd.s32 0, 0
    %s47 = smul.u32 24, %s46
    %s48 = sadd.s32 0, 0
    %s49 = smul.u32 24, %s48
    %p50 = scmp.lt.s32.totalorder %s49, 23
    %s51 = scalar_select %p50, %s49, 23
    %s52 = smul.addr %s51, 4
    %s53 = scalar_lea.vmem %s1, %s52
    %s54 = sadd.s32 0, 0
    %s55 = smul.u32 24, %s54
    %p56 = scmp.eq.s32.totalorder 0, 0
    // Predicated region
    $region10: #{tpu_custom_call.1} parent=1 // pred_check
      %p57 = pneg %p56
    $region11: #{tpu_custom_call.1} parent=1 // pred_check_branch
      %59 = sbr.rel (%p57) target = $region13
    $region12: #{tpu_custom_call.1} parent=1 // pred_region
      %vm60 = vcmask 647168
      %61 = vst.msk [vmem:[#allocation2] sm:$0x1] %vm60, 0.0
    $region13: #{tpu_custom_call.1} parent=1 // pred_fallthru
      _
    %v62 = vld [vmem:[%s45] sm:$0xff]
    %v63 = vld [vmem:[%s45 + $0x8] sm:$0xff]
    %v64 = vld [vmem:[%s45 + $0x10] sm:$0xff]
    %v65 = vld [vmem:[%s45 + $0x18] sm:$0xff]
    %v66 = vld [vmem:[%s45 + $0x20] sm:$0xff]
    %v67 = vld [vmem:[%s45 + $0x28] sm:$0xff]
    %v68 = vld [vmem:[%s45 + $0x30] sm:$0xff]
    %v69 = vld [vmem:[%s45 + $0x38] sm:$0xff]
    %v70 = vld [vmem:[%s45 + $0x40] sm:$0xff]
    %v71 = vld [vmem:[%s45 + $0x48] sm:$0xff]
    %v72 = vld [vmem:[%s45 + $0x50] sm:$0xff]
    %v73 = vld [vmem:[%s45 + $0x58] sm:$0xff]
    %v74 = vld [vmem:[%s45 + $0x60] sm:$0xff]
    %v75 = vld [vmem:[%s45 + $0x68] sm:$0xff]
    %v76 = vld [vmem:[%s45 + $0x70] sm:$0xff]
    %v77 = vld [vmem:[%s45 + $0x78] sm:$0xff]
    %v78 = vld [vmem:[%s45 + $0x80] sm:$0xff]
    %v79 = vld [vmem:[%s45 + $0x88] sm:$0xff]
    %v80 = vld [vmem:[%s45 + $0x90] sm:$0xff]
    %v81 = vld [vmem:[%s45 + $0x98] sm:$0xff]
    %v82 = vld [vmem:[%s45 + $0xa0] sm:$0xff]
    %v83 = vld [vmem:[%s45 + $0xa8] sm:$0xff]
    %v84 = vld [vmem:[%s45 + $0xb0] sm:$0xff]
    %v85 = vld [vmem:[%s45 + $0xb8] sm:$0xff]
    %v86 = vld [vmem:[%s53] sm:$0xf]
    %v87 = vld [vmem:[%s53 + $0x4] sm:$0xf]
    %v88 = vld [vmem:[%s53 + $0x8] sm:$0xf]
    %v89 = vld [vmem:[%s53 + $0xc] sm:$0xf]
    %v90 = vld [vmem:[%s53 + $0x10] sm:$0xf]
    %v91 = vld [vmem:[%s53 + $0x14] sm:$0xf]
    %v92 = vld [vmem:[%s53 + $0x18] sm:$0xf]
    %v93 = vld [vmem:[%s53 + $0x1c] sm:$0xf]
    %v94 = vld [vmem:[%s53 + $0x20] sm:$0xf]
    %v95 = vld [vmem:[%s53 + $0x24] sm:$0xf]
    %v96 = vld [vmem:[%s53 + $0x28] sm:$0xf]
    %v97 = vld [vmem:[%s53 + $0x2c] sm:$0xf]
    %v98 = vld [vmem:[%s53 + $0x30] sm:$0xf]
    %v99 = vld [vmem:[%s53 + $0x34] sm:$0xf]
    %v100 = vld [vmem:[%s53 + $0x38] sm:$0xf]
    %v101 = vld [vmem:[%s53 + $0x3c] sm:$0xf]
    %v102 = vld [vmem:[%s53 + $0x40] sm:$0xf]
    %v103 = vld [vmem:[%s53 + $0x44] sm:$0xf]
    %v104 = vld [vmem:[%s53 + $0x48] sm:$0xf]
    %v105 = vld [vmem:[%s53 + $0x4c] sm:$0xf]
    %v106 = vld [vmem:[%s53 + $0x50] sm:$0xf]
    %v107 = vld [vmem:[%s53 + $0x54] sm:$0xf]
    %v108 = vld [vmem:[%s53 + $0x58] sm:$0xf]
    %v109 = vld [vmem:[%s53 + $0x5c] sm:$0xf]
    %v110 = vunpack.c.l.b16 %v86
    %v111 = vunpack.c.l.b16 %v87
    %v112 = vunpack.c.l.b16 %v88
    %v113 = vunpack.c.l.b16 %v89
    %v114 = vunpack.c.l.b16 %v90
    %v115 = vunpack.c.l.b16 %v91
    %v116 = vunpack.c.l.b16 %v92
    %v117 = vunpack.c.l.b16 %v93
    %v118 = vunpack.c.l.b16 %v94
    %v119 = vunpack.c.l.b16 %v95
    %v120 = vunpack.c.l.b16 %v96
    %v121 = vunpack.c.l.b16 %v97
    %v122 = vunpack.c.l.b16 %v98
    %v123 = vunpack.c.l.b16 %v99
    %v124 = vunpack.c.l.b16 %v100
    %v125 = vunpack.c.l.b16 %v101
    %v126 = vunpack.c.l.b16 %v102
    %v127 = vunpack.c.l.b16 %v103
    %v128 = vunpack.c.l.b16 %v104
    %v129 = vunpack.c.l.b16 %v105
    %v130 = vunpack.c.l.b16 %v106
    %v131 = vunpack.c.l.b16 %v107
    %v132 = vunpack.c.l.b16 %v108
    %v133 = vunpack.c.l.b16 %v109
    %v134 = vlaneseq
    %v135 = vand.u32 %v134, 127
    %v136 = vand.u32 2147483647, %v62
    %v137 = vand.u32 2147483647, %v63
    %v138 = vand.u32 2147483647, %v64
    %v139 = vand.u32 2147483647, %v65
    %v140 = vand.u32 2147483647, %v66
    %v141 = vand.u32 2147483647, %v67
    %v142 = vand.u32 2147483647, %v68
    %v143 = vand.u32 2147483647, %v69
    %v144 = vand.u32 2147483647, %v70
    %v145 = vand.u32 2147483647, %v71
    %v146 = vand.u32 2147483647, %v72
    %v147 = vand.u32 2147483647, %v73
    %v148 = vand.u32 2147483647, %v74
    %v149 = vand.u32 2147483647, %v75
    %v150 = vand.u32 2147483647, %v76
    %v151 = vand.u32 2147483647, %v77
    %v152 = vand.u32 2147483647, %v78
    %v153 = vand.u32 2147483647, %v79
    %v154 = vand.u32 2147483647, %v80
    %v155 = vand.u32 2147483647, %v81
    %v156 = vand.u32 2147483647, %v82
    %v157 = vand.u32 2147483647, %v83
    %v158 = vand.u32 2147483647, %v84
    %v159 = vand.u32 2147483647, %v85
    %v160 = vsub.f32 0.0, %v136
    %v161 = vsub.f32 0.0, %v137
    %v162 = vsub.f32 0.0, %v138
    %v163 = vsub.f32 0.0, %v139
    %v164 = vsub.f32 0.0, %v140
    %v165 = vsub.f32 0.0, %v141
    %v166 = vsub.f32 0.0, %v142
    %v167 = vsub.f32 0.0, %v143
    %v168 = vsub.f32 0.0, %v144
    %v169 = vsub.f32 0.0, %v145
    %v170 = vsub.f32 0.0, %v146
    %v171 = vsub.f32 0.0, %v147
    %v172 = vsub.f32 0.0, %v148
    %v173 = vsub.f32 0.0, %v149
    %v174 = vsub.f32 0.0, %v150
    %v175 = vsub.f32 0.0, %v151
    %v176 = vsub.f32 0.0, %v152
    %v177 = vsub.f32 0.0, %v153
    %v178 = vsub.f32 0.0, %v154
    %v179 = vsub.f32 0.0, %v155
    %v180 = vsub.f32 0.0, %v156
    %v181 = vsub.f32 0.0, %v157
    %v182 = vsub.f32 0.0, %v158
    %v183 = vsub.f32 0.0, %v159
    %v184 = vmul.f32 %v160, 1.442695
    %v185 = vpow.pop %v184
    %v186 = vmul.f32 %v161, 1.442695
    %v187 = vpow.pop %v186
    %v188 = vmul.f32 %v162, 1.442695
    %v189 = vpow.pop %v188
    %v190 = vmul.f32 %v163, 1.442695
    %v191 = vpow.pop %v190
    %v192 = vmul.f32 %v164, 1.442695
    %v193 = vpow.pop %v192
    %v194 = vmul.f32 %v165, 1.442695
    %v195 = vpow.pop %v194
    %v196 = vmul.f32 %v166, 1.442695
    %v197 = vpow.pop %v196
    %v198 = vmul.f32 %v167, 1.442695
    %v199 = vpow.pop %v198
    %v200 = vmul.f32 %v168, 1.442695
    %v201 = vpow.pop %v200
    %v202 = vmul.f32 %v169, 1.442695
    %v203 = vpow.pop %v202
    %v204 = vmul.f32 %v170, 1.442695
    %v205 = vpow.pop %v204
    %v206 = vmul.f32 %v171, 1.442695
    %v207 = vpow.pop %v206
    %v208 = vmul.f32 %v172, 1.442695
    %v209 = vpow.pop %v208
    %v210 = vmul.f32 %v173, 1.442695
    %v211 = vpow.pop %v210
    %v212 = vmul.f32 %v174, 1.442695
    %v213 = vpow.pop %v212
    %v214 = vmul.f32 %v175, 1.442695
    %v215 = vpow.pop %v214
    %v216 = vmul.f32 %v176, 1.442695
    %v217 = vpow.pop %v216
    %v218 = vmul.f32 %v177, 1.442695
    %v219 = vpow.pop %v218
    %v220 = vmul.f32 %v178, 1.442695
    %v221 = vpow.pop %v220
    %v222 = vmul.f32 %v179, 1.442695
    %v223 = vpow.pop %v222
    %v224 = vmul.f32 %v180, 1.442695
    %v225 = vpow.pop %v224
    %v226 = vmul.f32 %v181, 1.442695
    %v227 = vpow.pop %v226
    %v228 = vmul.f32 %v182, 1.442695
    %v229 = vpow.pop %v228
    %v230 = vmul.f32 %v183, 1.442695
    %v231 = vpow.pop %v230
    %v232 = vmax.f32 %v62, 0.0
    %v233 = vmax.f32 %v63, 0.0
    %v234 = vmax.f32 %v64, 0.0
    %v235 = vmax.f32 %v65, 0.0
    %v236 = vmax.f32 %v66, 0.0
    %v237 = vmax.f32 %v67, 0.0
    %v238 = vmax.f32 %v68, 0.0
    %v239 = vmax.f32 %v69, 0.0
    %v240 = vmax.f32 %v70, 0.0
    %v241 = vmax.f32 %v71, 0.0
    %v242 = vmax.f32 %v72, 0.0
    %v243 = vmax.f32 %v73, 0.0
    %v244 = vmax.f32 %v74, 0.0
    %v245 = vmax.f32 %v75, 0.0
    %v246 = vmax.f32 %v76, 0.0
    %v247 = vmax.f32 %v77, 0.0
    %v248 = vmax.f32 %v78, 0.0
    %v249 = vmax.f32 %v79, 0.0
    %v250 = vmax.f32 %v80, 0.0
    %v251 = vmax.f32 %v81, 0.0
    %v252 = vmax.f32 %v82, 0.0
    %v253 = vmax.f32 %v83, 0.0
    %v254 = vmax.f32 %v84, 0.0
    %v255 = vmax.f32 %v85, 0.0
    %v256 = vadd.f32 %v185, 1.0
    %v257 = vadd.f32 %v187, 1.0
    %v258 = vadd.f32 %v189, 1.0
    %v259 = vadd.f32 %v191, 1.0
    %v260 = vadd.f32 %v193, 1.0
    %v261 = vadd.f32 %v195, 1.0
    %v262 = vadd.f32 %v197, 1.0
    %v263 = vadd.f32 %v199, 1.0
    %v264 = vadd.f32 %v201, 1.0
    %v265 = vadd.f32 %v203, 1.0
    %v266 = vadd.f32 %v205, 1.0
    %v267 = vadd.f32 %v207, 1.0
    %v268 = vadd.f32 %v209, 1.0
    %v269 = vadd.f32 %v211, 1.0
    %v270 = vadd.f32 %v213, 1.0
    %v271 = vadd.f32 %v215, 1.0
    %v272 = vadd.f32 %v217, 1.0
    %v273 = vadd.f32 %v219, 1.0
    %v274 = vadd.f32 %v221, 1.0
    %v275 = vadd.f32 %v223, 1.0
    %v276 = vadd.f32 %v225, 1.0
    %v277 = vadd.f32 %v227, 1.0
    %v278 = vadd.f32 %v229, 1.0
    %v279 = vadd.f32 %v231, 1.0
    %v280 = vlog2.pop %v256
    %v281 = vmul.f32 %v280, 0.6931472
    %v282 = vlog2.pop %v257
    %v283 = vmul.f32 %v282, 0.6931472
    %v284 = vlog2.pop %v258
    %v285 = vmul.f32 %v284, 0.6931472
    %v286 = vlog2.pop %v259
    %v287 = vmul.f32 %v286, 0.6931472
    %v288 = vlog2.pop %v260
    %v289 = vmul.f32 %v288, 0.6931472
    %v290 = vlog2.pop %v261
    %v291 = vmul.f32 %v290, 0.6931472
    %v292 = vlog2.pop %v262
    %v293 = vmul.f32 %v292, 0.6931472
    %v294 = vlog2.pop %v263
    %v295 = vmul.f32 %v294, 0.6931472
    %v296 = vlog2.pop %v264
    %v297 = vmul.f32 %v296, 0.6931472
    %v298 = vlog2.pop %v265
    %v299 = vmul.f32 %v298, 0.6931472
    %v300 = vlog2.pop %v266
    %v301 = vmul.f32 %v300, 0.6931472
    %v302 = vlog2.pop %v267
    %v303 = vmul.f32 %v302, 0.6931472
    %v304 = vlog2.pop %v268
    %v305 = vmul.f32 %v304, 0.6931472
    %v306 = vlog2.pop %v269
    %v307 = vmul.f32 %v306, 0.6931472
    %v308 = vlog2.pop %v270
    %v309 = vmul.f32 %v308, 0.6931472
    %v310 = vlog2.pop %v271
    %v311 = vmul.f32 %v310, 0.6931472
    %v312 = vlog2.pop %v272
    %v313 = vmul.f32 %v312, 0.6931472
    %v314 = vlog2.pop %v273
    %v315 = vmul.f32 %v314, 0.6931472
    %v316 = vlog2.pop %v274
    %v317 = vmul.f32 %v316, 0.6931472
    %v318 = vlog2.pop %v275
    %v319 = vmul.f32 %v318, 0.6931472
    %v320 = vlog2.pop %v276
    %v321 = vmul.f32 %v320, 0.6931472
    %v322 = vlog2.pop %v277
    %v323 = vmul.f32 %v322, 0.6931472
    %v324 = vlog2.pop %v278
    %v325 = vmul.f32 %v324, 0.6931472
    %v326 = vlog2.pop %v279
    %v327 = vmul.f32 %v326, 0.6931472
    %v328 = vadd.f32 %v232, %v281
    %v329 = vadd.f32 %v233, %v283
    %v330 = vadd.f32 %v234, %v285
    %v331 = vadd.f32 %v235, %v287
    %v332 = vadd.f32 %v236, %v289
    %v333 = vadd.f32 %v237, %v291
    %v334 = vadd.f32 %v238, %v293
    %v335 = vadd.f32 %v239, %v295
    %v336 = vadd.f32 %v240, %v297
    %v337 = vadd.f32 %v241, %v299
    %v338 = vadd.f32 %v242, %v301
    %v339 = vadd.f32 %v243, %v303
    %v340 = vadd.f32 %v244, %v305
    %v341 = vadd.f32 %v245, %v307
    %v342 = vadd.f32 %v246, %v309
    %v343 = vadd.f32 %v247, %v311
    %v344 = vadd.f32 %v248, %v313
    %v345 = vadd.f32 %v249, %v315
    %v346 = vadd.f32 %v250, %v317
    %v347 = vadd.f32 %v251, %v319
    %v348 = vadd.f32 %v252, %v321
    %v349 = vadd.f32 %v253, %v323
    %v350 = vadd.f32 %v254, %v325
    %v351 = vadd.f32 %v255, %v327
    %v352 = vsub.f32 %v62, %v328
    %v353 = vsub.f32 %v63, %v329
    %v354 = vsub.f32 %v64, %v330
    %v355 = vsub.f32 %v65, %v331
    %v356 = vsub.f32 %v66, %v332
    %v357 = vsub.f32 %v67, %v333
    %v358 = vsub.f32 %v68, %v334
    %v359 = vsub.f32 %v69, %v335
    %v360 = vsub.f32 %v70, %v336
    %v361 = vsub.f32 %v71, %v337
    %v362 = vsub.f32 %v72, %v338
    %v363 = vsub.f32 %v73, %v339
    %v364 = vsub.f32 %v74, %v340
    %v365 = vsub.f32 %v75, %v341
    %v366 = vsub.f32 %v76, %v342
    %v367 = vsub.f32 %v77, %v343
    %v368 = vsub.f32 %v78, %v344
    %v369 = vsub.f32 %v79, %v345
    %v370 = vsub.f32 %v80, %v346
    %v371 = vsub.f32 %v81, %v347
    %v372 = vsub.f32 %v82, %v348
    %v373 = vsub.f32 %v83, %v349
    %v374 = vsub.f32 %v84, %v350
    %v375 = vsub.f32 %v85, %v351
    %v376 = vsub.f32 0.0, %v328
    %v377 = vsub.f32 0.0, %v329
    %v378 = vsub.f32 0.0, %v330
    %v379 = vsub.f32 0.0, %v331
    %v380 = vsub.f32 0.0, %v332
    %v381 = vsub.f32 0.0, %v333
    %v382 = vsub.f32 0.0, %v334
    %v383 = vsub.f32 0.0, %v335
    %v384 = vsub.f32 0.0, %v336
    %v385 = vsub.f32 0.0, %v337
    %v386 = vsub.f32 0.0, %v338
    %v387 = vsub.f32 0.0, %v339
    %v388 = vsub.f32 0.0, %v340
    %v389 = vsub.f32 0.0, %v341
    %v390 = vsub.f32 0.0, %v342
    %v391 = vsub.f32 0.0, %v343
    %v392 = vsub.f32 0.0, %v344
    %v393 = vsub.f32 0.0, %v345
    %v394 = vsub.f32 0.0, %v346
    %v395 = vsub.f32 0.0, %v347
    %v396 = vsub.f32 0.0, %v348
    %v397 = vsub.f32 0.0, %v349
    %v398 = vsub.f32 0.0, %v350
    %v399 = vsub.f32 0.0, %v351
    %vm400 = vcmp.ge.f32.partialorder %v62, 0.0
    %vm401 = vcmp.ge.f32.partialorder %v63, 0.0
    %vm402 = vcmp.ge.f32.partialorder %v64, 0.0
    %vm403 = vcmp.ge.f32.partialorder %v65, 0.0
    %vm404 = vcmp.ge.f32.partialorder %v66, 0.0
    %vm405 = vcmp.ge.f32.partialorder %v67, 0.0
    %vm406 = vcmp.ge.f32.partialorder %v68, 0.0
    %vm407 = vcmp.ge.f32.partialorder %v69, 0.0
    %vm408 = vcmp.ge.f32.partialorder %v70, 0.0
    %vm409 = vcmp.ge.f32.partialorder %v71, 0.0
    %vm410 = vcmp.ge.f32.partialorder %v72, 0.0
    %vm411 = vcmp.ge.f32.partialorder %v73, 0.0
    %vm412 = vcmp.ge.f32.partialorder %v74, 0.0
    %vm413 = vcmp.ge.f32.partialorder %v75, 0.0
    %vm414 = vcmp.ge.f32.partialorder %v76, 0.0
    %vm415 = vcmp.ge.f32.partialorder %v77, 0.0
    %vm416 = vcmp.ge.f32.partialorder %v78, 0.0
    %vm417 = vcmp.ge.f32.partialorder %v79, 0.0
    %vm418 = vcmp.ge.f32.partialorder %v80, 0.0
    %vm419 = vcmp.ge.f32.partialorder %v81, 0.0
    %vm420 = vcmp.ge.f32.partialorder %v82, 0.0
    %vm421 = vcmp.ge.f32.partialorder %v83, 0.0
    %vm422 = vcmp.ge.f32.partialorder %v84, 0.0
    %vm423 = vcmp.ge.f32.partialorder %v85, 0.0
    %v424 = vsel %vm400, 1.0, %v185
    %v425 = vsel %vm401, 1.0, %v187
    %v426 = vsel %vm402, 1.0, %v189
    %v427 = vsel %vm403, 1.0, %v191
    %v428 = vsel %vm404, 1.0, %v193
    %v429 = vsel %vm405, 1.0, %v195
    %v430 = vsel %vm406, 1.0, %v197
    %v431 = vsel %vm407, 1.0, %v199
    %v432 = vsel %vm408, 1.0, %v201
    %v433 = vsel %vm409, 1.0, %v203
    %v434 = vsel %vm410, 1.0, %v205
    %v435 = vsel %vm411, 1.0, %v207
    %v436 = vsel %vm412, 1.0, %v209
    %v437 = vsel %vm413, 1.0, %v211
    %v438 = vsel %vm414, 1.0, %v213
    %v439 = vsel %vm415, 1.0, %v215
    %v440 = vsel %vm416, 1.0, %v217
    %v441 = vsel %vm417, 1.0, %v219
    %v442 = vsel %vm418, 1.0, %v221
    %v443 = vsel %vm419, 1.0, %v223
    %v444 = vsel %vm420, 1.0, %v225
    %v445 = vsel %vm421, 1.0, %v227
    %v446 = vsel %vm422, 1.0, %v229
    %v447 = vsel %vm423, 1.0, %v231
    %v448 = vrcp.pop %v256
    %v449 = vrcp.pop %v257
    %v450 = vrcp.pop %v258
    %v451 = vrcp.pop %v259
    %v452 = vrcp.pop %v260
    %v453 = vrcp.pop %v261
    %v454 = vrcp.pop %v262
    %v455 = vrcp.pop %v263
    %v456 = vrcp.pop %v264
    %v457 = vrcp.pop %v265
    %v458 = vrcp.pop %v266
    %v459 = vrcp.pop %v267
    %v460 = vrcp.pop %v268
    %v461 = vrcp.pop %v269
    %v462 = vrcp.pop %v270
    %v463 = vrcp.pop %v271
    %v464 = vrcp.pop %v272
    %v465 = vrcp.pop %v273
    %v466 = vrcp.pop %v274
    %v467 = vrcp.pop %v275
    %v468 = vrcp.pop %v276
    %v469 = vrcp.pop %v277
    %v470 = vrcp.pop %v278
    %v471 = vrcp.pop %v279
    %v472 = vmul.f32 %v424, %v448
    %v473 = vmul.f32 %v425, %v449
    %v474 = vmul.f32 %v426, %v450
    %v475 = vmul.f32 %v427, %v451
    %v476 = vmul.f32 %v428, %v452
    %v477 = vmul.f32 %v429, %v453
    %v478 = vmul.f32 %v430, %v454
    %v479 = vmul.f32 %v431, %v455
    %v480 = vmul.f32 %v432, %v456
    %v481 = vmul.f32 %v433, %v457
    %v482 = vmul.f32 %v434, %v458
    %v483 = vmul.f32 %v435, %v459
    %v484 = vmul.f32 %v436, %v460
    %v485 = vmul.f32 %v437, %v461
    %v486 = vmul.f32 %v438, %v462
    %v487 = vmul.f32 %v439, %v463
    %v488 = vmul.f32 %v440, %v464
    %v489 = vmul.f32 %v441, %v465
    %v490 = vmul.f32 %v442, %v466
    %v491 = vmul.f32 %v443, %v467
    %v492 = vmul.f32 %v444, %v468
    %v493 = vmul.f32 %v445, %v469
    %v494 = vmul.f32 %v446, %v470
    %v495 = vmul.f32 %v447, %v471
    %v496 = vsub.f32 1.0, %v472
    %v497 = vsub.f32 1.0, %v473
    %v498 = vsub.f32 1.0, %v474
    %v499 = vsub.f32 1.0, %v475
    %v500 = vsub.f32 1.0, %v476
    %v501 = vsub.f32 1.0, %v477
    %v502 = vsub.f32 1.0, %v478
    %v503 = vsub.f32 1.0, %v479
    %v504 = vsub.f32 1.0, %v480
    %v505 = vsub.f32 1.0, %v481
    %v506 = vsub.f32 1.0, %v482
    %v507 = vsub.f32 1.0, %v483
    %v508 = vsub.f32 1.0, %v484
    %v509 = vsub.f32 1.0, %v485
    %v510 = vsub.f32 1.0, %v486
    %v511 = vsub.f32 1.0, %v487
    %v512 = vsub.f32 1.0, %v488
    %v513 = vsub.f32 1.0, %v489
    %v514 = vsub.f32 1.0, %v490
    %v515 = vsub.f32 1.0, %v491
    %v516 = vsub.f32 1.0, %v492
    %v517 = vsub.f32 1.0, %v493
    %v518 = vsub.f32 1.0, %v494
    %v519 = vsub.f32 1.0, %v495
    %v520 = vmul.f32 %v496, %v496
    %v521 = vmul.f32 %v497, %v497
    %v522 = vmul.f32 %v498, %v498
    %v523 = vmul.f32 %v499, %v499
    %v524 = vmul.f32 %v500, %v500
    %v525 = vmul.f32 %v501, %v501
    %v526 = vmul.f32 %v502, %v502
    %v527 = vmul.f32 %v503, %v503
    %v528 = vmul.f32 %v504, %v504
    %v529 = vmul.f32 %v505, %v505
    %v530 = vmul.f32 %v506, %v506
    %v531 = vmul.f32 %v507, %v507
    %v532 = vmul.f32 %v508, %v508
    %v533 = vmul.f32 %v509, %v509
    %v534 = vmul.f32 %v510, %v510
    %v535 = vmul.f32 %v511, %v511
    %v536 = vmul.f32 %v512, %v512
    %v537 = vmul.f32 %v513, %v513
    %v538 = vmul.f32 %v514, %v514
    %v539 = vmul.f32 %v515, %v515
    %v540 = vmul.f32 %v516, %v516
    %v541 = vmul.f32 %v517, %v517
    %v542 = vmul.f32 %v518, %v518
    %v543 = vmul.f32 %v519, %v519
    %v544 = vmul.f32 %v520, %v352
    %v545 = vmul.f32 %v521, %v353
    %v546 = vmul.f32 %v522, %v354
    %v547 = vmul.f32 %v523, %v355
    %v548 = vmul.f32 %v524, %v356
    %v549 = vmul.f32 %v525, %v357
    %v550 = vmul.f32 %v526, %v358
    %v551 = vmul.f32 %v527, %v359
    %v552 = vmul.f32 %v528, %v360
    %v553 = vmul.f32 %v529, %v361
    %v554 = vmul.f32 %v530, %v362
    %v555 = vmul.f32 %v531, %v363
    %v556 = vmul.f32 %v532, %v364
    %v557 = vmul.f32 %v533, %v365
    %v558 = vmul.f32 %v534, %v366
    %v559 = vmul.f32 %v535, %v367
    %v560 = vmul.f32 %v536, %v368
    %v561 = vmul.f32 %v537, %v369
    %v562 = vmul.f32 %v538, %v370
    %v563 = vmul.f32 %v539, %v371
    %v564 = vmul.f32 %v540, %v372
    %v565 = vmul.f32 %v541, %v373
    %v566 = vmul.f32 %v542, %v374
    %v567 = vmul.f32 %v543, %v375
    %v568 = vmul.f32 %v472, %v472
    %v569 = vmul.f32 %v473, %v473
    %v570 = vmul.f32 %v474, %v474
    %v571 = vmul.f32 %v475, %v475
    %v572 = vmul.f32 %v476, %v476
    %v573 = vmul.f32 %v477, %v477
    %v574 = vmul.f32 %v478, %v478
    %v575 = vmul.f32 %v479, %v479
    %v576 = vmul.f32 %v480, %v480
    %v577 = vmul.f32 %v481, %v481
    %v578 = vmul.f32 %v482, %v482
    %v579 = vmul.f32 %v483, %v483
    %v580 = vmul.f32 %v484, %v484
    %v581 = vmul.f32 %v485, %v485
    %v582 = vmul.f32 %v486, %v486
    %v583 = vmul.f32 %v487, %v487
    %v584 = vmul.f32 %v488, %v488
    %v585 = vmul.f32 %v489, %v489
    %v586 = vmul.f32 %v490, %v490
    %v587 = vmul.f32 %v491, %v491
    %v588 = vmul.f32 %v492, %v492
    %v589 = vmul.f32 %v493, %v493
    %v590 = vmul.f32 %v494, %v494
    %v591 = vmul.f32 %v495, %v495
    %v592 = vmul.f32 %v568, %v376
    %v593 = vmul.f32 %v569, %v377
    %v594 = vmul.f32 %v570, %v378
    %v595 = vmul.f32 %v571, %v379
    %v596 = vmul.f32 %v572, %v380
    %v597 = vmul.f32 %v573, %v381
    %v598 = vmul.f32 %v574, %v382
    %v599 = vmul.f32 %v575, %v383
    %v600 = vmul.f32 %v576, %v384
    %v601 = vmul.f32 %v577, %v385
    %v602 = vmul.f32 %v578, %v386
    %v603 = vmul.f32 %v579, %v387
    %v604 = vmul.f32 %v580, %v388
    %v605 = vmul.f32 %v581, %v389
    %v606 = vmul.f32 %v582, %v390
    %v607 = vmul.f32 %v583, %v391
    %v608 = vmul.f32 %v584, %v392
    %v609 = vmul.f32 %v585, %v393
    %v610 = vmul.f32 %v586, %v394
    %v611 = vmul.f32 %v587, %v395
    %v612 = vmul.f32 %v588, %v396
    %v613 = vmul.f32 %v589, %v397
    %v614 = vmul.f32 %v590, %v398
    %v615 = vmul.f32 %v591, %v399
    %616 = vset.pattern.permute.xlu0 0
    %617 = vperm.xlu0 %616, %v110
    %v618 = vpop.permute.xlu0 %617
    %619 = vset.pattern.permute.xlu0 0
    %620 = vperm.xlu0 %619, %v111
    %v621 = vpop.permute.xlu0 %620
    %622 = vset.pattern.permute.xlu0 0
    %623 = vperm.xlu0 %622, %v112
    %v624 = vpop.permute.xlu0 %623
    %625 = vset.pattern.permute.xlu0 0
    %626 = vperm.xlu0 %625, %v113
    %v627 = vpop.permute.xlu0 %626
    %628 = vset.pattern.permute.xlu0 0
    %629 = vperm.xlu0 %628, %v114
    %v630 = vpop.permute.xlu0 %629
    %631 = vset.pattern.permute.xlu0 0
    %632 = vperm.xlu0 %631, %v115
    %v633 = vpop.permute.xlu0 %632
    %634 = vset.pattern.permute.xlu0 0
    %635 = vperm.xlu0 %634, %v116
    %v636 = vpop.permute.xlu0 %635
    %637 = vset.pattern.permute.xlu0 0
    %638 = vperm.xlu0 %637, %v117
    %v639 = vpop.permute.xlu0 %638
    %640 = vset.pattern.permute.xlu0 0
    %641 = vperm.xlu0 %640, %v118
    %v642 = vpop.permute.xlu0 %641
    %643 = vset.pattern.permute.xlu0 0
    %644 = vperm.xlu0 %643, %v119
    %v645 = vpop.permute.xlu0 %644
    %646 = vset.pattern.permute.xlu0 0
    %647 = vperm.xlu0 %646, %v120
    %v648 = vpop.permute.xlu0 %647
    %649 = vset.pattern.permute.xlu0 0
    %650 = vperm.xlu0 %649, %v121
    %v651 = vpop.permute.xlu0 %650
    %652 = vset.pattern.permute.xlu0 0
    %653 = vperm.xlu0 %652, %v122
    %v654 = vpop.permute.xlu0 %653
    %655 = vset.pattern.permute.xlu0 0
    %656 = vperm.xlu0 %655, %v123
    %v657 = vpop.permute.xlu0 %656
    %658 = vset.pattern.permute.xlu0 0
    %659 = vperm.xlu0 %658, %v124
    %v660 = vpop.permute.xlu0 %659
    %661 = vset.pattern.permute.xlu0 0
    %662 = vperm.xlu0 %661, %v125
    %v663 = vpop.permute.xlu0 %662
    %664 = vset.pattern.permute.xlu0 0
    %665 = vperm.xlu0 %664, %v126
    %v666 = vpop.permute.xlu0 %665
    %667 = vset.pattern.permute.xlu0 0
    %668 = vperm.xlu0 %667, %v127
    %v669 = vpop.permute.xlu0 %668
    %670 = vset.pattern.permute.xlu0 0
    %671 = vperm.xlu0 %670, %v128
    %v672 = vpop.permute.xlu0 %671
    %673 = vset.pattern.permute.xlu0 0
    %674 = vperm.xlu0 %673, %v129
    %v675 = vpop.permute.xlu0 %674
    %676 = vset.pattern.permute.xlu0 0
    %677 = vperm.xlu0 %676, %v130
    %v678 = vpop.permute.xlu0 %677
    %679 = vset.pattern.permute.xlu0 0
    %680 = vperm.xlu0 %679, %v131
    %v681 = vpop.permute.xlu0 %680
    %682 = vset.pattern.permute.xlu0 0
    %683 = vperm.xlu0 %682, %v132
    %v684 = vpop.permute.xlu0 %683
    %685 = vset.pattern.permute.xlu0 0
    %686 = vperm.xlu0 %685, %v133
    %v687 = vpop.permute.xlu0 %686
    %vm688 = vcmp.eq.s32.totalorder %v618, %v135
    %vm689 = vcmp.eq.s32.totalorder %v621, %v135
    %vm690 = vcmp.eq.s32.totalorder %v624, %v135
    %vm691 = vcmp.eq.s32.totalorder %v627, %v135
    %vm692 = vcmp.eq.s32.totalorder %v630, %v135
    %vm693 = vcmp.eq.s32.totalorder %v633, %v135
    %vm694 = vcmp.eq.s32.totalorder %v636, %v135
    %vm695 = vcmp.eq.s32.totalorder %v639, %v135
    %vm696 = vcmp.eq.s32.totalorder %v642, %v135
    %vm697 = vcmp.eq.s32.totalorder %v645, %v135
    %vm698 = vcmp.eq.s32.totalorder %v648, %v135
    %vm699 = vcmp.eq.s32.totalorder %v651, %v135
    %vm700 = vcmp.eq.s32.totalorder %v654, %v135
    %vm701 = vcmp.eq.s32.totalorder %v657, %v135
    %vm702 = vcmp.eq.s32.totalorder %v660, %v135
    %vm703 = vcmp.eq.s32.totalorder %v663, %v135
    %vm704 = vcmp.eq.s32.totalorder %v666, %v135
    %vm705 = vcmp.eq.s32.totalorder %v669, %v135
    %vm706 = vcmp.eq.s32.totalorder %v672, %v135
    %vm707 = vcmp.eq.s32.totalorder %v675, %v135
    %vm708 = vcmp.eq.s32.totalorder %v678, %v135
    %vm709 = vcmp.eq.s32.totalorder %v681, %v135
    %vm710 = vcmp.eq.s32.totalorder %v684, %v135
    %vm711 = vcmp.eq.s32.totalorder %v687, %v135
    %vm712 = vcmp.ge.s32.totalorder %v110, 0
    %vm713 = vcmp.ge.s32.totalorder %v111, 0
    %vm714 = vcmp.ge.s32.totalorder %v112, 0
    %vm715 = vcmp.ge.s32.totalorder %v113, 0
    %vm716 = vcmp.ge.s32.totalorder %v114, 0
    %vm717 = vcmp.ge.s32.totalorder %v115, 0
    %vm718 = vcmp.ge.s32.totalorder %v116, 0
    %vm719 = vcmp.ge.s32.totalorder %v117, 0
    %vm720 = vcmp.ge.s32.totalorder %v118, 0
    %vm721 = vcmp.ge.s32.totalorder %v119, 0
    %vm722 = vcmp.ge.s32.totalorder %v120, 0
    %vm723 = vcmp.ge.s32.totalorder %v121, 0
    %vm724 = vcmp.ge.s32.totalorder %v122, 0
    %vm725 = vcmp.ge.s32.totalorder %v123, 0
    %vm726 = vcmp.ge.s32.totalorder %v124, 0
    %vm727 = vcmp.ge.s32.totalorder %v125, 0
    %vm728 = vcmp.ge.s32.totalorder %v126, 0
    %vm729 = vcmp.ge.s32.totalorder %v127, 0
    %vm730 = vcmp.ge.s32.totalorder %v128, 0
    %vm731 = vcmp.ge.s32.totalorder %v129, 0
    %vm732 = vcmp.ge.s32.totalorder %v130, 0
    %vm733 = vcmp.ge.s32.totalorder %v131, 0
    %vm734 = vcmp.ge.s32.totalorder %v132, 0
    %vm735 = vcmp.ge.s32.totalorder %v133, 0
    %v736 = vmul.f32 %v544, -0.25
    %v737 = vmul.f32 %v545, -0.25
    %v738 = vmul.f32 %v546, -0.25
    %v739 = vmul.f32 %v547, -0.25
    %v740 = vmul.f32 %v548, -0.25
    %v741 = vmul.f32 %v549, -0.25
    %v742 = vmul.f32 %v550, -0.25
    %v743 = vmul.f32 %v551, -0.25
    %v744 = vmul.f32 %v552, -0.25
    %v745 = vmul.f32 %v553, -0.25
    %v746 = vmul.f32 %v554, -0.25
    %v747 = vmul.f32 %v555, -0.25
    %v748 = vmul.f32 %v556, -0.25
    %v749 = vmul.f32 %v557, -0.25
    %v750 = vmul.f32 %v558, -0.25
    %v751 = vmul.f32 %v559, -0.25
    %v752 = vmul.f32 %v560, -0.25
    %v753 = vmul.f32 %v561, -0.25
    %v754 = vmul.f32 %v562, -0.25
    %v755 = vmul.f32 %v563, -0.25
    %v756 = vmul.f32 %v564, -0.25
    %v757 = vmul.f32 %v565, -0.25
    %v758 = vmul.f32 %v566, -0.25
    %v759 = vmul.f32 %v567, -0.25
    %v760 = vmul.f32 %v592, -0.75
    %v761 = vmul.f32 %v593, -0.75
    %v762 = vmul.f32 %v594, -0.75
    %v763 = vmul.f32 %v595, -0.75
    %v764 = vmul.f32 %v596, -0.75
    %v765 = vmul.f32 %v597, -0.75
    %v766 = vmul.f32 %v598, -0.75
    %v767 = vmul.f32 %v599, -0.75
    %v768 = vmul.f32 %v600, -0.75
    %v769 = vmul.f32 %v601, -0.75
    %v770 = vmul.f32 %v602, -0.75
    %v771 = vmul.f32 %v603, -0.75
    %v772 = vmul.f32 %v604, -0.75
    %v773 = vmul.f32 %v605, -0.75
    %v774 = vmul.f32 %v606, -0.75
    %v775 = vmul.f32 %v607, -0.75
    %v776 = vmul.f32 %v608, -0.75
    %v777 = vmul.f32 %v609, -0.75
    %v778 = vmul.f32 %v610, -0.75
    %v779 = vmul.f32 %v611, -0.75
    %v780 = vmul.f32 %v612, -0.75
    %v781 = vmul.f32 %v613, -0.75
    %v782 = vmul.f32 %v614, -0.75
    %v783 = vmul.f32 %v615, -0.75
    %v784 = vsel %vm712, 1, 0
    %v785 = vsel %vm713, 1, 0
    %v786 = vsel %vm714, 1, 0
    %v787 = vsel %vm715, 1, 0
    %v788 = vsel %vm716, 1, 0
    %v789 = vsel %vm717, 1, 0
    %v790 = vsel %vm718, 1, 0
    %v791 = vsel %vm719, 1, 0
    %v792 = vsel %vm720, 1, 0
    %v793 = vsel %vm721, 1, 0
    %v794 = vsel %vm722, 1, 0
    %v795 = vsel %vm723, 1, 0
    %v796 = vsel %vm724, 1, 0
    %v797 = vsel %vm725, 1, 0
    %v798 = vsel %vm726, 1, 0
    %v799 = vsel %vm727, 1, 0
    %v800 = vsel %vm728, 1, 0
    %v801 = vsel %vm729, 1, 0
    %v802 = vsel %vm730, 1, 0
    %v803 = vsel %vm731, 1, 0
    %v804 = vsel %vm732, 1, 0
    %v805 = vsel %vm733, 1, 0
    %v806 = vsel %vm734, 1, 0
    %v807 = vsel %vm735, 1, 0
    %808 = vset.pattern.permute.xlu0 0
    %809 = vperm.xlu0 %808, %v784
    %v810 = vpop.permute.xlu0 %809
    %811 = vset.pattern.permute.xlu0 0
    %812 = vperm.xlu0 %811, %v785
    %v813 = vpop.permute.xlu0 %812
    %814 = vset.pattern.permute.xlu0 0
    %815 = vperm.xlu0 %814, %v786
    %v816 = vpop.permute.xlu0 %815
    %817 = vset.pattern.permute.xlu0 0
    %818 = vperm.xlu0 %817, %v787
    %v819 = vpop.permute.xlu0 %818
    %820 = vset.pattern.permute.xlu0 0
    %821 = vperm.xlu0 %820, %v788
    %v822 = vpop.permute.xlu0 %821
    %823 = vset.pattern.permute.xlu0 0
    %824 = vperm.xlu0 %823, %v789
    %v825 = vpop.permute.xlu0 %824
    %826 = vset.pattern.permute.xlu0 0
    %827 = vperm.xlu0 %826, %v790
    %v828 = vpop.permute.xlu0 %827
    %829 = vset.pattern.permute.xlu0 0
    %830 = vperm.xlu0 %829, %v791
    %v831 = vpop.permute.xlu0 %830
    %832 = vset.pattern.permute.xlu0 0
    %833 = vperm.xlu0 %832, %v792
    %v834 = vpop.permute.xlu0 %833
    %835 = vset.pattern.permute.xlu0 0
    %836 = vperm.xlu0 %835, %v793
    %v837 = vpop.permute.xlu0 %836
    %838 = vset.pattern.permute.xlu0 0
    %839 = vperm.xlu0 %838, %v794
    %v840 = vpop.permute.xlu0 %839
    %841 = vset.pattern.permute.xlu0 0
    %842 = vperm.xlu0 %841, %v795
    %v843 = vpop.permute.xlu0 %842
    %844 = vset.pattern.permute.xlu0 0
    %845 = vperm.xlu0 %844, %v796
    %v846 = vpop.permute.xlu0 %845
    %847 = vset.pattern.permute.xlu0 0
    %848 = vperm.xlu0 %847, %v797
    %v849 = vpop.permute.xlu0 %848
    %850 = vset.pattern.permute.xlu0 0
    %851 = vperm.xlu0 %850, %v798
    %v852 = vpop.permute.xlu0 %851
    %853 = vset.pattern.permute.xlu0 0
    %854 = vperm.xlu0 %853, %v799
    %v855 = vpop.permute.xlu0 %854
    %856 = vset.pattern.permute.xlu0 0
    %857 = vperm.xlu0 %856, %v800
    %v858 = vpop.permute.xlu0 %857
    %859 = vset.pattern.permute.xlu0 0
    %860 = vperm.xlu0 %859, %v801
    %v861 = vpop.permute.xlu0 %860
    %862 = vset.pattern.permute.xlu0 0
    %863 = vperm.xlu0 %862, %v802
    %v864 = vpop.permute.xlu0 %863
    %865 = vset.pattern.permute.xlu0 0
    %866 = vperm.xlu0 %865, %v803
    %v867 = vpop.permute.xlu0 %866
    %868 = vset.pattern.permute.xlu0 0
    %869 = vperm.xlu0 %868, %v804
    %v870 = vpop.permute.xlu0 %869
    %871 = vset.pattern.permute.xlu0 0
    %872 = vperm.xlu0 %871, %v805
    %v873 = vpop.permute.xlu0 %872
    %874 = vset.pattern.permute.xlu0 0
    %875 = vperm.xlu0 %874, %v806
    %v876 = vpop.permute.xlu0 %875
    %877 = vset.pattern.permute.xlu0 0
    %878 = vperm.xlu0 %877, %v807
    %v879 = vpop.permute.xlu0 %878
    %vm880 = vcmp.eq.s32.totalorder %v810, 1
    %vm881 = vcmp.eq.s32.totalorder %v813, 1
    %vm882 = vcmp.eq.s32.totalorder %v816, 1
    %vm883 = vcmp.eq.s32.totalorder %v819, 1
    %vm884 = vcmp.eq.s32.totalorder %v822, 1
    %vm885 = vcmp.eq.s32.totalorder %v825, 1
    %vm886 = vcmp.eq.s32.totalorder %v828, 1
    %vm887 = vcmp.eq.s32.totalorder %v831, 1
    %vm888 = vcmp.eq.s32.totalorder %v834, 1
    %vm889 = vcmp.eq.s32.totalorder %v837, 1
    %vm890 = vcmp.eq.s32.totalorder %v840, 1
    %vm891 = vcmp.eq.s32.totalorder %v843, 1
    %vm892 = vcmp.eq.s32.totalorder %v846, 1
    %vm893 = vcmp.eq.s32.totalorder %v849, 1
    %vm894 = vcmp.eq.s32.totalorder %v852, 1
    %vm895 = vcmp.eq.s32.totalorder %v855, 1
    %vm896 = vcmp.eq.s32.totalorder %v858, 1
    %vm897 = vcmp.eq.s32.totalorder %v861, 1
    %vm898 = vcmp.eq.s32.totalorder %v864, 1
    %vm899 = vcmp.eq.s32.totalorder %v867, 1
    %vm900 = vcmp.eq.s32.totalorder %v870, 1
    %vm901 = vcmp.eq.s32.totalorder %v873, 1
    %vm902 = vcmp.eq.s32.totalorder %v876, 1
    %vm903 = vcmp.eq.s32.totalorder %v879, 1
    %v904 = vsel %vm880, %v760, 0.0
    %v905 = vsel %vm881, %v761, 0.0
    %v906 = vsel %vm882, %v762, 0.0
    %v907 = vsel %vm883, %v763, 0.0
    %v908 = vsel %vm884, %v764, 0.0
    %v909 = vsel %vm885, %v765, 0.0
    %v910 = vsel %vm886, %v766, 0.0
    %v911 = vsel %vm887, %v767, 0.0
    %v912 = vsel %vm888, %v768, 0.0
    %v913 = vsel %vm889, %v769, 0.0
    %v914 = vsel %vm890, %v770, 0.0
    %v915 = vsel %vm891, %v771, 0.0
    %v916 = vsel %vm892, %v772, 0.0
    %v917 = vsel %vm893, %v773, 0.0
    %v918 = vsel %vm894, %v774, 0.0
    %v919 = vsel %vm895, %v775, 0.0
    %v920 = vsel %vm896, %v776, 0.0
    %v921 = vsel %vm897, %v777, 0.0
    %v922 = vsel %vm898, %v778, 0.0
    %v923 = vsel %vm899, %v779, 0.0
    %v924 = vsel %vm900, %v780, 0.0
    %v925 = vsel %vm901, %v781, 0.0
    %v926 = vsel %vm902, %v782, 0.0
    %v927 = vsel %vm903, %v783, 0.0
    %v928 = vsel %vm688, %v736, %v904
    %v929 = vsel %vm689, %v737, %v905
    %v930 = vsel %vm690, %v738, %v906
    %v931 = vsel %vm691, %v739, %v907
    %v932 = vsel %vm692, %v740, %v908
    %v933 = vsel %vm693, %v741, %v909
    %v934 = vsel %vm694, %v742, %v910
    %v935 = vsel %vm695, %v743, %v911
    %v936 = vsel %vm696, %v744, %v912
    %v937 = vsel %vm697, %v745, %v913
    %v938 = vsel %vm698, %v746, %v914
    %v939 = vsel %vm699, %v747, %v915
    %v940 = vsel %vm700, %v748, %v916
    %v941 = vsel %vm701, %v749, %v917
    %v942 = vsel %vm702, %v750, %v918
    %v943 = vsel %vm703, %v751, %v919
    %v944 = vsel %vm704, %v752, %v920
    %v945 = vsel %vm705, %v753, %v921
    %v946 = vsel %vm706, %v754, %v922
    %v947 = vsel %vm707, %v755, %v923
    %v948 = vsel %vm708, %v756, %v924
    %v949 = vsel %vm709, %v757, %v925
    %v950 = vsel %vm710, %v758, %v926
    %v951 = vsel %vm711, %v759, %v927
    %v952 = vld [vmem:[#allocation2] sm:$0x1]
    %vm953 = vcmask 654336
    %v954 = vsel %vm953, %v928, 0.0
    %v955 = vsel %vm953, %v929, 0.0
    %v956 = vadd.f32 %v954, %v955
    %v957 = vsel %vm953, %v930, 0.0
    %v958 = vadd.f32 %v956, %v957
    %v959 = vsel %vm953, %v931, 0.0
    %v960 = vadd.f32 %v958, %v959
    %v961 = vsel %vm953, %v932, 0.0
    %v962 = vadd.f32 %v960, %v961
    %v963 = vsel %vm953, %v933, 0.0
    %v964 = vadd.f32 %v962, %v963
    %v965 = vsel %vm953, %v934, 0.0
    %v966 = vadd.f32 %v964, %v965
    %v967 = vsel %vm953, %v935, 0.0
    %v968 = vadd.f32 %v966, %v967
    %v969 = vsel %vm953, %v936, 0.0
    %v970 = vadd.f32 %v968, %v969
    %v971 = vsel %vm953, %v937, 0.0
    %v972 = vadd.f32 %v970, %v971
    %v973 = vsel %vm953, %v938, 0.0
    %v974 = vadd.f32 %v972, %v973
    %v975 = vsel %vm953, %v939, 0.0
    %v976 = vadd.f32 %v974, %v975
    %v977 = vsel %vm953, %v940, 0.0
    %v978 = vadd.f32 %v976, %v977
    %v979 = vsel %vm953, %v941, 0.0
    %v980 = vadd.f32 %v978, %v979
    %v981 = vsel %vm953, %v942, 0.0
    %v982 = vadd.f32 %v980, %v981
    %v983 = vsel %vm953, %v943, 0.0
    %v984 = vadd.f32 %v982, %v983
    %v985 = vsel %vm953, %v944, 0.0
    %v986 = vadd.f32 %v984, %v985
    %v987 = vsel %vm953, %v945, 0.0
    %v988 = vadd.f32 %v986, %v987
    %v989 = vsel %vm953, %v946, 0.0
    %v990 = vadd.f32 %v988, %v989
    %v991 = vsel %vm953, %v947, 0.0
    %v992 = vadd.f32 %v990, %v991
    %v993 = vsel %vm953, %v948, 0.0
    %v994 = vadd.f32 %v992, %v993
    %v995 = vsel %vm953, %v949, 0.0
    %v996 = vadd.f32 %v994, %v995
    %v997 = vsel %vm953, %v950, 0.0
    %v998 = vadd.f32 %v996, %v997
    %v999 = vsel %vm953, %v951, 0.0
    %v1000 = vadd.f32 %v998, %v999
    %v1001 = vrot.slane %v1000, 4
    %v1002 = vadd.f32 %v1000, %v1001
    %v1003 = vrot.slane %v1002, 2
    %v1004 = vadd.f32 %v1002, %v1003
    %v1005 = vrot.slane %v1004, 1
    %v1006 = vadd.f32 %v1004, %v1005
    %v1007 = vadd.f32 %v952, %v1006
    %vm1008 = vcmask 647168
    %1009 = vst.msk [vmem:[#allocation2] sm:$0x1] %vm1008, %v1007
    // Predicated region
    $region14: #{tpu_custom_call.1} parent=1 // pred_check
      %p1010 = pneg %p56
    $region15: #{tpu_custom_call.1} parent=1 // pred_check_branch
      %1012 = sbr.rel (%p1010) target = $region17
    $region16: #{tpu_custom_call.1} parent=1 // pred_region
      %v1013 = vld [vmem:[#allocation2] sm:$0x1]
      %1014 = vst.msk [vmem:[#allocation3] sm:$0x1] %vm1008, %v1013
    $region17: #{tpu_custom_call.1} parent=1 // pred_fallthru
      _
    // Predicated region
    $region18: #{tpu_custom_call.1} parent=1 // pred_check
      _
    $region19: #{tpu_custom_call.1} parent=1 // pred_check_branch
      %1016 = sbr.rel (0) target = $region21
    $region20: #{tpu_custom_call.1} parent=1 // pred_region
      %s1018 = ssub.s32 16, 16
      %1019 = vsyncadd [#allocation4], %s1018
      %s1021 = sshll.u32 [#allocation3], 4
      %s1022 = int_to_ptr.vmem [resolvable:$true] %s1021
      %1024 = dma.vmem_to_hbm [thread:$0]  %s1022, 16, %s2, [#allocation4]
    $region21: #{tpu_custom_call.1} parent=1 // pred_fallthru
      _
    // Predicated region
    $region22: #{tpu_custom_call.1} parent=1 // pred_check
      _
    $region23: #{tpu_custom_call.1} parent=1 // pred_check_branch
      %1026 = sbr.rel (0) target = $region25
    $region24: #{tpu_custom_call.1} parent=1 // pred_region
      %1027 = dma.done [#allocation4], 16
    $region25: #{tpu_custom_call.1} parent=1 // pred_fallthru
      _
    %1028 = vsyncpa [#allocation4], 1

</llo_original>
